<compile_context>
chip_gen: v7x
topology: tpu7x:2x2x1
jax: 0.10.0
libtpu: 0.0.40
codegen_flags: <defaults>
</compile_context>

<pallas_src>
import math

import jax
import jax.numpy as jnp
from jax.experimental import pallas as pl
from jax.experimental.pallas import tpu as pltpu


def _pe_add_3d_kernel(x_ref, pe_ref, o_ref):
    # x_ref : (tB, tS, D) input tile
    # pe_ref: (tS, D) positional-encoding tile, broadcast over the batch tile
    # o_ref : (tB, tS, D) output tile
    o_ref[...] = x_ref[...] + pe_ref[...]


def _pe_add_2d_kernel(x_ref, pe_ref, o_ref):
    # x_ref : (tB, tL) flattened input tile (lane-dense last axis)
    # pe_ref: (1, tL) flattened pe row, broadcast over the batch tile
    # o_ref : (tB, tL) output tile
    o_ref[...] = x_ref[...] + pe_ref[...]


def make_positional_encoding(d_model: int, num_positions: int = 100,
                             dtype=jnp.float32) -> jnp.ndarray:
    """Sinusoidal PE table, identical to the PyTorch __init__ (buffer `pe`)."""
    if d_model % 2 != 0:
        raise ValueError("d_model must be even (same constraint as the PyTorch module).")
    position = jnp.arange(num_positions, dtype=jnp.float32)[:, None]            # (P, 1)
    div_term = jnp.exp(jnp.arange(0, d_model, 2, dtype=jnp.float32)
                       * (-math.log(10000.0) / d_model))                        # (D/2,)
    pe = jnp.zeros((num_positions, d_model), dtype=jnp.float32)
    pe = pe.at[:, 0::2].set(jnp.sin(position * div_term))
    pe = pe.at[:, 1::2].set(jnp.cos(position * div_term))
    return pe.astype(dtype)                                                     # (P, D)


def _sublane_quantum(itemsize: int) -> int:
    # f32 -> 8, bf16 -> 16, int8/fp8 -> 32 (packed sublane quantum)
    return max(8, 32 // max(1, itemsize))


def _vmem_budget():
    """Generation-dependent (block_bytes, vmem_limit_bytes)."""
    try:
        cap = int(getattr(pltpu.get_tpu_info(), "vmem_capacity_bytes", 0))
    except Exception:
        cap = 0
    if cap <= 0:
        cap = 64 * 1024 * 1024            # conservative (v7x-sized) default
    if cap >= 96 * 1024 * 1024:           # v5e / v6e: 128 MiB physical VMEM
        return 8 * 1024 * 1024, 64 * 1024 * 1024
    # v7x: 64 MiB per TensorCore -> keep pipeline buffers well under the limit.
    return 4 * 1024 * 1024, 48 * 1024 * 1024


def _choose_tiles_3d(B, S, D, itemsize, block_bytes):
    """Pick (tB, tS) for (tB, tS, D) blocks; D kept whole (lane-dense, D%128==0)."""
    q = _sublane_quantum(itemsize)
    row_bytes = max(1, D * itemsize)
    budget_rows = max(q, block_bytes // row_bytes)
    if S <= budget_rows:
        tS = S                              # whole sequence in one block
    else:
        tS = max(q, (budget_rows // q) * q)  # q-multiple; edge block handled by Pallas
    tB = max(1, min(B, budget_rows // max(1, tS)))
    return tB, tS


def _choose_tiles_2d(B, L, itemsize, block_bytes):
    """Pick (tB, tL) for (tB, tL) flattened blocks; tL a multiple of 128 (or == L)."""
    q = _sublane_quantum(itemsize)
    budget_elems = max(q * 128, block_bytes // max(1, itemsize))
    min_rows = min(B, q)
    lane_budget = max(128, budget_elems // min_rows)
    tL = L if L <= lane_budget else (lane_budget // 128) * 128
    rows = max(1, budget_elems // max(1, tL))
    if rows >= B:
        tB = B                              # full batch per block (always legal)
    else:
        tB = (rows // q) * q                # rows >= q is guaranteed here
    return tB, tL


def positional_encoding_forward(x: jnp.ndarray, pe: jnp.ndarray, *,
                                block_bytes: int | None = None,
                                vmem_limit_bytes: int | None = None,
                                min_pallas_bytes: int = 256 * 1024,
                                donate_x: bool = False) -> jnp.ndarray:
    """x: (B, S, D); pe: (num_positions, D). Returns x + pe[:S] (broadcast over B)."""
    B, S, D = x.shape
    P = pe.shape[0]
    if S > P:
        raise ValueError(f"sequence length {S} exceeds num_positions {P}")
    if pe.shape[1] != D:
        raise ValueError("d_model mismatch between x and pe")

    # In a stateful module this cast (and the pe[:S] slice below) would be
    # hoisted to __init__; here it is a no-op when dtypes already match.
    if pe.dtype != x.dtype:
        pe = pe.astype(x.dtype)

    total_bytes = x.size * x.dtype.itemsize
    if total_bytes < min_pallas_bytes:
        # Tiny input: kernel launch + per-grid-step overhead dominates; let XLA fuse it.
        return x + pe[:S][None, :, :]

    default_block, default_vmem = _vmem_budget()
    if vmem_limit_bytes is None:
        vmem_limit_bytes = default_vmem
    if block_bytes is None:
        block_bytes = default_block
    # Double-buffered x + out + pe ~= 6 block-sized buffers; keep them under the limit.
    block_bytes = max(8 * 128 * x.dtype.itemsize, min(block_bytes, vmem_limit_bytes // 6))

    compiler_params = pltpu.CompilerParams(
        # Sequence axis outer / batch axis inner.  Both "parallel": on v7x the
        # two TensorCores split the outer s-blocks (each keeps its own resident
        # pe tile); on v5e/v6e this is neutral.
        dimension_semantics=("parallel", "parallel"),
        vmem_limit_bytes=vmem_limit_bytes,
    )
    itemsize = x.dtype.itemsize

    if D % 128 == 0:
        # Lane-dense already: keep the natural (B, S, D) layout.
        tB, tS = _choose_tiles_3d(B, S, D, itemsize, block_bytes)
        if tS == S:
            # Full-S block: slice the table so the block shape equals the full
            # array dims (layout-legal for any S).
            pe_in = pe[:S]
            pe_spec = pl.BlockSpec((S, D), lambda s, b: (0, 0))
        else:
            # Windowed full table: with batch innermost, the pe tile is re-DMA'd
            # only when the sequence-block index changes.  If the last window
            # reaches past S (or past P), those rows align with padded x rows and
            # masked output stores, so results are unaffected.
            pe_in = pe
            pe_spec = pl.BlockSpec((tS, D), lambda s, b: (s, 0))

        grid = (pl.cdiv(S, tS), pl.cdiv(B, tB))   # (sequence outer, batch inner)
        return pl.pallas_call(
            _pe_add_3d_kernel,
            out_shape=jax.ShapeDtypeStruct((B, S, D), x.dtype),
            grid_spec=pltpu.PrefetchScalarGridSpec(
                num_scalar_prefetch=0,
                grid=grid,
                in_specs=[
                    pl.BlockSpec((tB, tS, D), lambda s, b: (b, s, 0)),  # x tile
                    pe_spec,                                            # shared pe tile
                ],
                out_specs=pl.BlockSpec((tB, tS, D), lambda s, b: (b, s, 0)),
            ),
            compiler_params=compiler_params,
            input_output_aliases={0: 0} if donate_x else {},
        )(x, pe_in)

    # D not a multiple of 128: collapse (S, D) into one lane-dense axis so the
    # store path uses full-width vst (only the final edge block, if any, is
    # masked).  Reshapes are free row-major collapses in the wrapper.
    L = S * D
    x2 = x.reshape(B, L)
    pe_row = pe[:S].reshape(1, L)     # broadcast over batch inside the kernel
    tB, tL = _choose_tiles_2d(B, L, itemsize, block_bytes)
    grid = (pl.cdiv(L, tL), pl.cdiv(B, tB))   # (lane/sequence outer, batch inner)

    out2 = pl.pallas_call(
        _pe_add_2d_kernel,
        out_shape=jax.ShapeDtypeStruct((B, L), x.dtype),
        grid_spec=pltpu.PrefetchScalarGridSpec(
            num_scalar_prefetch=0,
            grid=grid,
            in_specs=[
                pl.BlockSpec((tB, tL), lambda l, b: (b, l)),   # x tile
                pl.BlockSpec((1, tL), lambda l, b: (0, l)),    # pe row tile (resident over b)
            ],
            out_specs=pl.BlockSpec((tB, tL), lambda l, b: (b, l)),
        ),
        compiler_params=compiler_params,
        input_output_aliases={0: 0} if donate_x else {},
    )(x2, pe_row)
    return out2.reshape(B, S, D)


if __name__ == "__main__":
    key1, key2, key3 = jax.random.split(jax.random.PRNGKey(0), 3)

    # Case 1: module-scale smoke test (tiny shapes; D=32 -> flattened lane-dense path).
    B, S, D, P = 2, 8, 32, 100
    x = jax.random.normal(key1, (B, S, D), dtype=jnp.float32)
    pe = make_positional_encoding(D, P)
    out = positional_encoding_forward(x, pe, min_pallas_bytes=0)
    out = jax.block_until_ready(out)
    ref = x + pe[:S][None, :, :]
    assert out.shape == (B, S, D)
    assert jnp.allclose(out, ref, atol=1e-6), "case 1 mismatch vs reference"

    # Case 2: lane-dense D=128 with a small block budget to exercise the
    # multi-block (sequence-outer, batch-inner) tiled 3-D grid path.
    B2, S2, D2, P2 = 4, 256, 128, 256
    x2 = jax.random.normal(key2, (B2, S2, D2), dtype=jnp.float32)
    pe2 = make_positional_encoding(D2, P2)
    out2 = positional_encoding_forward(x2, pe2, block_bytes=64 * 1024,
                                       min_pallas_bytes=0)
    out2 = jax.block_until_ready(out2)
    ref2 = x2 + pe2[:S2][None, :, :]
    assert out2.shape == (B2, S2, D2)
    assert jnp.allclose(out2, ref2, atol=1e-6), "case 2 mismatch vs reference"

    # Case 3: D not a multiple of 128 with multiple lane tiles (ragged edge block)
    # to exercise the flattened 2-D path's masked edge handling.
    B3, S3, D3, P3 = 4, 48, 40, 64
    x3 = jax.random.normal(key3, (B3, S3, D3), dtype=jnp.float32)
    pe3 = make_positional_encoding(D3, P3)
    out3 = positional_encoding_forward(x3, pe3, block_bytes=4 * 1024,
                                       min_pallas_bytes=0)
    out3 = jax.block_until_ready(out3)
    ref3 = x3 + pe3[:S3][None, :, :]
    assert out3.shape == (B3, S3, D3)
    assert jnp.allclose(out3, ref3, atol=1e-6), "case 3 mismatch vs reference"

    print("KERNEL_OK")
</pallas_src>

<mosaic_0001>
module attributes {stable_mosaic.version = 11 : i64} {
  func.func @_pe_add_2d_kernel(%arg0: i32, %arg1: i32, %arg2: memref<2x256xf32, #tpu.memory_space<vmem>>, %arg3: memref<1x256xf32, #tpu.memory_space<vmem>>, %arg4: memref<2x256xf32, #tpu.memory_space<vmem>>) attributes {dimension_semantics = [#tpu.dimension_semantics<parallel>, #tpu.dimension_semantics<parallel>], iteration_bounds = array<i64: 1, 1>, scalar_prefetch = 0 : i64, scratch_operands = 0 : i64, tpu.core_type = #tpu.core_type<tc>, window_params = [{transform_indices = @transform_0, window_bounds = array<i64: 2, 256>}, {transform_indices = @transform_1, window_bounds = array<i64: 1, 256>}, {transform_indices = @transform_2, window_bounds = array<i64: 2, 256>}]} {
    %c0 = arith.constant 0 : index
    %c0_0 = arith.constant 0 : index
    %0 = vector.load %arg2[%c0, %c0_0] : memref<2x256xf32, #tpu.memory_space<vmem>>, vector<2x256xf32>
    %c0_1 = arith.constant 0 : index
    %c0_2 = arith.constant 0 : index
    %1 = vector.load %arg3[%c0_1, %c0_2] : memref<1x256xf32, #tpu.memory_space<vmem>>, vector<1x256xf32>
    %2 = vector.broadcast %1 : vector<1x256xf32> to vector<2x256xf32>
    %3 = arith.addf %0, %2 : vector<2x256xf32>
    %c0_3 = arith.constant 0 : index
    %c0_4 = arith.constant 0 : index
    %4 = vector.load %arg4[%c0_3, %c0_4] : memref<2x256xf32, #tpu.memory_space<vmem>>, vector<2x256xf32>
    tpu.vector_store %arg4[%c0_3, %c0_4], %3 {strides = array<i32>} : memref<2x256xf32, #tpu.memory_space<vmem>>, vector<2x256xf32>,
    return
  }
  func.func @transform_0(%arg0: i32, %arg1: i32) -> (i32, i32) {
    %c0_i32 = arith.constant 0 : i32
    return %arg1, %arg0 : i32, i32
  }
  func.func @transform_1(%arg0: i32, %arg1: i32) -> (i32, i32) {
    %c0_i32 = arith.constant 0 : i32
    %c0_i32_0 = arith.constant 0 : i32
    return %c0_i32, %arg0 : i32, i32
  }
  func.func @transform_2(%arg0: i32, %arg1: i32) -> (i32, i32) {
    %c0_i32 = arith.constant 0 : i32
    return %arg1, %arg0 : i32, i32
  }
}

</mosaic_0001>

<llo_original>
// kernel: tpu_custom_call.1
$region0: #{tpu_custom_call.1}
  #allocation0 [shape = 'u32[]', space=smem, size = 0x4, offset = 0x4, fixed_abs, tag = 'smem constant byte address 0x4 - core index']
  #allocation1 [shape = 'u32[144,128]{1,0:T(1,128)}', space=vmem, size = 0x12000, scoped, tag = 'internal scratch']
  %s0 = inlined_call_operand.hbm [shape: f32[2,256], index: 0, kind: input, shape index: {}]
  %s1 = inlined_call_operand.vmem [shape: f32[1,256], index: 1, kind: input, shape index: {}]
  %s2 = inlined_call_operand.hbm [shape: f32[2,256], index: 2, kind: output, shape index: {}]
  %s3 = sld [smem:[#allocation0]]
  $region22: #{tpu_custom_call.1} parent=0
    _
  %s5 = ssub.s32 1, %s3
  %s6 = scalar_select 0, %s5, %s3
  $region1: #{tpu_custom_call.1} parent=0
    #allocation2 [shape = 'u8[2048]{0}', space=vmem, size = 0x800, scoped, tag = 'input window, operand 0, single buffered']
    #allocation3 [shape = 's32[1]{0}', space=sflag, size = 0x4, scoped, tag = 'scoped memory for tpu_custom_call.1']
    #allocation4 [shape = 's32[1]{0}', space=sflag, size = 0x4, scoped, tag = 'scoped memory for tpu_custom_call.1']
    #allocation5 [shape = 'u8[2048]{0}', space=vmem, size = 0x800, scoped, tag = 'output window, operand 0, single buffered']
    %7 = vsyncpa [#allocation3], 0
    %8 = vsyncpa [#allocation4], 0
    // Predicated region
    $region2: #{tpu_custom_call.1} parent=1 // pred_check
      _
    $region3: #{tpu_custom_call.1} parent=1 // pred_check_branch
      %10 = sbr.rel (0) target = $region5
    $region4: #{tpu_custom_call.1} parent=1 // pred_region
      %s12 = ssub.s32 64, 64
      %13 = vsyncadd [#allocation3], %s12
      %s15 = sshll.u32 [#allocation2], 4
      %s16 = int_to_ptr.vmem [resolvable:$true] %s15
      %18 = dma.hbm_to_vmem [thread:$0]  %s0, 64, %s16, [#allocation3]
    $region5: #{tpu_custom_call.1} parent=1 // pred_fallthru
      _
    // Predicated region
    $region6: #{tpu_custom_call.1} parent=1 // pred_check
      _
    $region7: #{tpu_custom_call.1} parent=1 // pred_check_branch
      %20 = sbr.rel (0) target = $region9
    $region8: #{tpu_custom_call.1} parent=1 // pred_region
      _
    $region9: #{tpu_custom_call.1} parent=1 // pred_fallthru
      _
    // Predicated region
    $region10: #{tpu_custom_call.1} parent=1 // pred_check
      _
    $region11: #{tpu_custom_call.1} parent=1 // pred_check_branch
      %22 = sbr.rel (0) target = $region13
    $region12: #{tpu_custom_call.1} parent=1 // pred_region
      %23 = dma.done [#allocation3], 64
    $region13: #{tpu_custom_call.1} parent=1 // pred_fallthru
      _
    %v24 = vld [vmem:[#allocation2] sm:$0xf]
    %v25 = vld [vmem:[%s1] sm:$0x3]
    %v27 = vlaneseq
    %v28 = vshrl.u32 %v27, 7
    %v29 = vsub.s32 0, %v28
    %v30 = vrot.slane %v25, %v29
    %v31 = vlaneseq
    %v32 = vshrl.u32 %v31, 7
    %v33 = vsub.s32 1, %v32
    %v34 = vrot.slane %v25, %v33
    %v35 = vcombine.low %v30, %v34
    %v37 = vunpack.c.l.s4 1983009808
    %v38 = vunpack.c.0.s8 %v37
    %v39 = vlaneseq
    %v40 = vshrl.u32 %v39, 7
    %v41 = vsub.s32 %v38, %v40
    %v42 = vrot.slane %v35, %v41
    %v44 = vadd.f32 %v24, %v42
    %45 = vst [vmem:[#allocation5] sm:$0xf] %v44
    // Predicated region
    $region14: #{tpu_custom_call.1} parent=1 // pred_check
      _
    $region15: #{tpu_custom_call.1} parent=1 // pred_check_branch
      %47 = sbr.rel (0) target = $region17
    $region16: #{tpu_custom_call.1} parent=1 // pred_region
      %s49 = ssub.s32 64, 64
      %50 = vsyncadd [#allocation4], %s49
      %s52 = sshll.u32 [#allocation5], 4
      %s53 = int_to_ptr.vmem [resolvable:$true] %s52
      %55 = dma.vmem_to_hbm [thread:$0]  %s53, 64, %s2, [#allocation4]
    $region17: #{tpu_custom_call.1} parent=1 // pred_fallthru
      _
    // Predicated region
    $region18: #{tpu_custom_call.1} parent=1 // pred_check
      _
    $region19: #{tpu_custom_call.1} parent=1 // pred_check_branch
      %57 = sbr.rel (0) target = $region21
    $region20: #{tpu_custom_call.1} parent=1 // pred_region
      %58 = dma.done [#allocation4], 64
    $region21: #{tpu_custom_call.1} parent=1 // pred_fallthru
      _
    %59 = vsyncpa [#allocation3], 1
    %60 = vsyncpa [#allocation4], 1

</llo_original>
